<compile_context>
chip_gen: v6e
topology: v6e:2x2x1
jax: 0.10.0
libtpu: 0.0.40
codegen_flags: <defaults>
</compile_context>

<pallas_src>
import functools

import jax
import jax.numpy as jnp
from jax import lax
from jax.experimental import pallas as pl
from jax.experimental.pallas import tpu as pltpu


def _round_up(x, m):
    return (x + m - 1) // m * m


def _cdiv(a, b):
    return (a + b - 1) // b


# ----------------------------------------------------------------------------
# Pallas kernel: one M-tile of (TM, K) @ (K, N) + bias(1, N)  (the conv hot path)
# ----------------------------------------------------------------------------
def _proj_matmul_kernel(a_ref, w_ref, b_ref, o_ref):
    # bf16 x bf16 -> f32 accumulation on the MXU; bias add stays in f32 and the
    # cast to the output dtype happens only at the store.
    acc = jnp.dot(a_ref[...], w_ref[...], preferred_element_type=jnp.float32)
    o_ref[...] = (acc + b_ref[...]).astype(o_ref.dtype)


def _proj_matmul(patches, w2d, bias, *, out_dtype=jnp.float32, tm=8192):
    """patches: (M, K) compute-dtype, w2d: (K, N) compute-dtype, bias: (N,)."""
    M, K = patches.shape
    _, N = w2d.shape
    a_isz = patches.dtype.itemsize
    w_isz = w2d.dtype.itemsize
    o_isz = jnp.dtype(out_dtype).itemsize

    # ---- M-tile selection ---------------------------------------------------
    Mp8 = _round_up(M, 8)
    # Keep the double-buffered working set comfortably under the 32 MiB scoped
    # VMEM limit (also valid on v7x's 64 MiB-total VMEM).
    budget = 24 * 1024 * 1024
    resident = 2 * (K * N * w_isz + N * 4)            # weight + bias buffers
    bytes_per_row = 2 * K * a_isz + 2 * N * o_isz     # streamed A + out, x2 buf
    tm_cap = max(8, (budget - resident) // bytes_per_row // 8 * 8)
    TM0 = min(tm, tm_cap, Mp8)
    n_tiles = _cdiv(Mp8, TM0)
    if n_tiles > 1 and n_tiles % 2 == 1:
        n_tiles += 1          # even tile count balances v7x's two TensorCores
    TM = min(_round_up(_cdiv(Mp8, n_tiles), 8), Mp8)
    Mp = TM * n_tiles

    # Only M is padded (zero rows, sliced off afterwards); K and N stay exact.
    a = patches if Mp == M else jnp.pad(patches, ((0, Mp - M), (0, 0)))
    b = bias.reshape(1, N).astype(jnp.float32)

    cost = pl.CostEstimate(
        flops=2 * Mp * K * N,
        transcendentals=0,
        bytes_accessed=Mp * K * a_isz + K * N * w_isz + N * 4 + Mp * N * o_isz,
    )

    out = pl.pallas_call(
        _proj_matmul_kernel,
        out_shape=jax.ShapeDtypeStruct((Mp, N), out_dtype),
        grid_spec=pltpu.PrefetchScalarGridSpec(
            num_scalar_prefetch=0,
            grid=(n_tiles,),
            in_specs=[
                # Streamed patches tile; K is the full (unpadded) array dim so
                # the dominant HBM read stream carries no padding bytes.
                pl.BlockSpec((TM, K), lambda i: (i, 0)),
                # Weight / bias: constant index_map -> fetched once, resident.
                pl.BlockSpec((K, N), lambda i: (0, 0)),
                pl.BlockSpec((1, N), lambda i: (0, 0)),
            ],
            # Unpadded N output: no 128/N write amplification, no post-slice.
            out_specs=pl.BlockSpec((TM, N), lambda i: (i, 0)),
        ),
        compiler_params=pltpu.CompilerParams(
            # Independent M tiles: shard across TensorCores on v7x megacore.
            dimension_semantics=("parallel",),
            vmem_limit_bytes=32 * 1024 * 1024,  # v5e default (16 MiB) blocks big TM
        ),
        cost_estimate=cost,
    )(a, w2d, b)

    return out if Mp == M else out[:M]


# ----------------------------------------------------------------------------
# PatchEmbedV2 forward (layout glue in plain JAX, projection matmul in Pallas)
# ----------------------------------------------------------------------------
def patch_embed_v2(x, weight, bias, *, patch_size=4, kernel_size=None,
                   compute_dtype=jnp.bfloat16, out_dtype=jnp.float32,
                   channels_last=False, tm=8192):
    """x: (B, C, H, W) float32.  weight: (E, C, k, k).  bias: (E,)."""
    if kernel_size is None:
        kernel_size = patch_size
    s, k = patch_size, kernel_size
    pad = (k - s + 1) // 2

    B, C, H, W = x.shape
    original_size = (H, W)

    # Pad odd H/W by duplicating the last row/column (torch.cat of x[..., -1:, :]).
    if H % 2 != 0:
        x = jnp.concatenate([x, x[:, :, -1:, :]], axis=2)
    if W % 2 != 0:
        x = jnp.concatenate([x, x[:, :, :, -1:]], axis=3)

    # Reflect padding of the conv (zero when kernel_size == patch_size).
    if pad > 0:
        x = jnp.pad(x, ((0, 0), (0, 0), (pad, pad), (pad, pad)), mode="reflect")

    # Cast once here so every following HBM pass (im2col relayout, kernel A
    # stream) moves bf16 bytes instead of f32.
    x = x.astype(compute_dtype)

    Bp, Cp, Hp, Wp = x.shape
    Ho = (Hp - k) // s + 1
    Wo = (Wp - k) // s + 1

    if k == s and pad == 0:
        # Non-overlapping patches: pure reshape/transpose im2col (one bf16 HBM
        # round trip).  Fusing this relayout into the matmul kernel (BlockSpec
        # over bands of patch rows + in-VMEM rearrangement) would remove this
        # pass entirely, but the tiny (C, s, s) minor dims make the in-kernel
        # transpose a Mosaic-lowering risk, so it is deliberately kept here.
        patches = x.reshape(Bp, Cp, Ho, s, Wo, s)
        patches = jnp.transpose(patches, (0, 2, 4, 1, 3, 5))    # (B,Ho,Wo,C,s,s)
        patches = patches.reshape(Bp * Ho * Wo, Cp * k * k)     # (M, K)
    else:
        # Overlapping / reflect-padded case: explicit k*k gather im2col (bf16).
        # TODO(synk): replace with lax.conv_general_dilated_patches or an
        # in-kernel DMA gather if this branch ever becomes hot.
        cols = []
        for ki in range(k):
            for kj in range(k):
                cols.append(
                    x[:, :, ki:ki + (Ho - 1) * s + 1:s, kj:kj + (Wo - 1) * s + 1:s]
                )                                               # (B, C, Ho, Wo)
        patches = jnp.stack(cols, axis=-1)                      # (B, C, Ho, Wo, k*k)
        patches = jnp.transpose(patches, (0, 2, 3, 1, 4))       # (B, Ho, Wo, C, k*k)
        patches = patches.reshape(Bp * Ho * Wo, Cp * k * k)     # (M, K)

    E = weight.shape[0]
    w2d = weight.reshape(E, Cp * k * k).T.astype(compute_dtype)  # (K, N)

    out = _proj_matmul(patches, w2d, bias, out_dtype=out_dtype, tm=tm)  # (M, E)
    out = out.reshape(Bp, Ho, Wo, E)
    if not channels_last:
        # Kept only to match the PyTorch module's NCHW output; TPU consumers
        # should pass channels_last=True and keep embed_dim lane-dense instead.
        out = jnp.transpose(out, (0, 3, 1, 2))                  # (B, E, Ho, Wo)
    return out, original_size


# ----------------------------------------------------------------------------
# Deterministic parameter init (matches nn.Conv2d default scheme in shape/scale)
# ----------------------------------------------------------------------------
def init_params(key, in_chans, embed_dim, kernel_size):
    fan_in = in_chans * kernel_size * kernel_size
    bound = 1.0 / jnp.sqrt(jnp.float32(fan_in))
    kw, kb = jax.random.split(key)
    weight = jax.random.uniform(
        kw, (embed_dim, in_chans, kernel_size, kernel_size),
        minval=-bound, maxval=bound, dtype=jnp.float32)
    bias = jax.random.uniform(
        kb, (embed_dim,), minval=-bound, maxval=bound, dtype=jnp.float32)
    return weight, bias


if __name__ == "__main__":
    # Small shapes consistent with the module: B=2, C=4, H=W=16,
    # patch_size=4 (kernel_size defaults to patch_size), embed_dim=32.
    B, C, H, W = 2, 4, 16, 16
    patch_size, embed_dim = 4, 32

    key = jax.random.PRNGKey(0)
    kx, kp = jax.random.split(key)
    x = jax.random.normal(kx, (B, C, H, W), dtype=jnp.float32)
    weight, bias = init_params(kp, C, embed_dim, patch_size)

    fwd = jax.jit(functools.partial(patch_embed_v2, patch_size=patch_size))
    out, orig = fwd(x, weight, bias)
    out = jax.block_until_ready(out)

    # Reference: XLA conv with the same bf16-operand / f32-accumulate precision
    # as the kernel (stride=patch, VALID since pad==0 here).
    ref = lax.conv_general_dilated(
        x.astype(jnp.bfloat16), weight.astype(jnp.bfloat16),
        window_strides=(patch_size, patch_size), padding="VALID",
        dimension_numbers=("NCHW", "OIHW", "NCHW"),
        preferred_element_type=jnp.float32) + bias[None, :, None, None]

    assert out.shape == (B, embed_dim, H // patch_size, W // patch_size)
    assert orig == (H, W)
    max_err = float(jnp.max(jnp.abs(out - ref)))
    assert jnp.allclose(out, ref, atol=2e-3, rtol=2e-3), max_err
    print("KERNEL_OK")
</pallas_src>

<mosaic_0001>
module attributes {stable_mosaic.version = 11 : i64} {
  func.func @_proj_matmul_kernel(%arg0: i32, %arg1: memref<32x64xbf16, #tpu.memory_space<vmem>>, %arg2: memref<64x32xbf16, #tpu.memory_space<vmem>>, %arg3: memref<1x32xf32, #tpu.memory_space<vmem>>, %arg4: memref<32x32xf32, #tpu.memory_space<vmem>>) attributes {dimension_semantics = [#tpu.dimension_semantics<parallel>], iteration_bounds = array<i64: 1>, scalar_prefetch = 0 : i64, scratch_operands = 0 : i64, tpu.core_type = #tpu.core_type<tc>, window_params = [{transform_indices = @transform_0, window_bounds = array<i64: 32, 64>}, {pipeline_mode = #tpu.pipeline_mode<synchronous>, transform_indices = @transform_1, window_bounds = array<i64: 64, 32>}, {pipeline_mode = #tpu.pipeline_mode<synchronous>, transform_indices = @transform_2, window_bounds = array<i64: 1, 32>}, {transform_indices = @transform_3, window_bounds = array<i64: 32, 32>}]} {
    %c0 = arith.constant 0 : index
    %c0_0 = arith.constant 0 : index
    %0 = vector.load %arg1[%c0, %c0_0] : memref<32x64xbf16, #tpu.memory_space<vmem>>, vector<32x64xbf16>
    %c0_1 = arith.constant 0 : index
    %c0_2 = arith.constant 0 : index
    %1 = vector.load %arg2[%c0_1, %c0_2] : memref<64x32xbf16, #tpu.memory_space<vmem>>, vector<64x32xbf16>
    %cst = arith.constant dense<0.000000e+00> : vector<32x32xf32>
    %2 = tpu.matmul %0, %1, %cst {dimension_numbers = #tpu.dot_dimension_numbers<[1], [0], [0], [1], [0, 0, 1, 1], [], []>} : vector<32x64xbf16>, vector<64x32xbf16>, vector<32x32xf32> -> vector<32x32xf32>
    %c0_3 = arith.constant 0 : index
    %c0_4 = arith.constant 0 : index
    %3 = vector.load %arg3[%c0_3, %c0_4] : memref<1x32xf32, #tpu.memory_space<vmem>>, vector<1x32xf32>
    %4 = vector.broadcast %3 : vector<1x32xf32> to vector<32x32xf32>
    %5 = arith.addf %2, %4 : vector<32x32xf32>
    %c0_5 = arith.constant 0 : index
    %c0_6 = arith.constant 0 : index
    %6 = vector.load %arg4[%c0_5, %c0_6] : memref<32x32xf32, #tpu.memory_space<vmem>>, vector<32x32xf32>
    tpu.vector_store %arg4[%c0_5, %c0_6], %5 {strides = array<i32>} : memref<32x32xf32, #tpu.memory_space<vmem>>, vector<32x32xf32>,
    return
  }
  func.func @transform_0(%arg0: i32) -> (i32, i32) {
    %c0_i32 = arith.constant 0 : i32
    %c0_i32_0 = arith.constant 0 : i32
    return %arg0, %c0_i32 : i32, i32
  }
  func.func @transform_1(%arg0: i32) -> (i32, i32) {
    %c0_i32 = arith.constant 0 : i32
    %c0_i32_0 = arith.constant 0 : i32
    %c0_i32_1 = arith.constant 0 : i32
    return %c0_i32, %c0_i32_0 : i32, i32
  }
  func.func @transform_2(%arg0: i32) -> (i32, i32) {
    %c0_i32 = arith.constant 0 : i32
    %c0_i32_0 = arith.constant 0 : i32
    %c0_i32_1 = arith.constant 0 : i32
    return %c0_i32, %c0_i32_0 : i32, i32
  }
  func.func @transform_3(%arg0: i32) -> (i32, i32) {
    %c0_i32 = arith.constant 0 : i32
    %c0_i32_0 = arith.constant 0 : i32
    return %arg0, %c0_i32 : i32, i32
  }
}

</mosaic_0001>

<llo_original>
// kernel: patch_embed_v2.1
$region0: #{patch_embed_v2.1}
  #allocation0 [shape = 'u32[]', space=smem, size = 0x4, offset = 0x4, fixed_abs, tag = 'smem constant byte address 0x4 - core index']
  #allocation1 [shape = 'u32[144,128]{1,0:T(1,128)}', space=vmem, size = 0x12000, scoped, tag = 'internal scratch']
  %s0 = inlined_call_operand.vmem [shape: bf16[32,64], index: 0, kind: input, shape index: {}]
  %s1 = inlined_call_operand.vmem [shape: bf16[64,32], index: 1, kind: input, shape index: {}]
  %s2 = inlined_call_operand.vmem [shape: f32[1,32], index: 2, kind: input, shape index: {}]
  %s3 = inlined_call_operand.hbm [shape: f32[32,32], index: 3, kind: output, shape index: {}]
  %s4 = sld [smem:[#allocation0]]
  $region22: #{patch_embed_v2.1} parent=0
    _
  %s6 = ssub.s32 1, %s4
  %s7 = scalar_select 0, %s6, %s4
  $region1: #{patch_embed_v2.1} parent=0
    #allocation2 [shape = 'u8[16384]{0}', space=vmem, size = 0x4000, scoped, tag = 'output window, operand 0, single buffered']
    #allocation3 [shape = 's32[1]{0}', space=sflag, size = 0x4, scoped, tag = 'scoped memory for patch_embed_v2.1']
    %8 = vsyncpa [#allocation3], 0
    // Predicated region
    $region2: #{patch_embed_v2.1} parent=1 // pred_check
      _
    $region3: #{patch_embed_v2.1} parent=1 // pred_check_branch
      %10 = sbr.rel (0) target = $region5
    $region4: #{patch_embed_v2.1} parent=1 // pred_region
      _
    $region5: #{patch_embed_v2.1} parent=1 // pred_fallthru
      _
    // Predicated region
    $region6: #{patch_embed_v2.1} parent=1 // pred_check
      _
    $region7: #{patch_embed_v2.1} parent=1 // pred_check_branch
      %12 = sbr.rel (0) target = $region9
    $region8: #{patch_embed_v2.1} parent=1 // pred_region
      _
    $region9: #{patch_embed_v2.1} parent=1 // pred_fallthru
      _
    // Predicated region
    $region10: #{patch_embed_v2.1} parent=1 // pred_check
      _
    $region11: #{patch_embed_v2.1} parent=1 // pred_check_branch
      %14 = sbr.rel (0) target = $region13
    $region12: #{patch_embed_v2.1} parent=1 // pred_region
      _
    $region13: #{patch_embed_v2.1} parent=1 // pred_fallthru
      _
    %v16 = vld [vmem:[%s0] sm:$0xf]
    %v17 = vld [vmem:[%s0 + $0x4] sm:$0xf]
    %v18 = vld [vmem:[%s0 + $0x8] sm:$0xf]
    %v19 = vld [vmem:[%s0 + $0xc] sm:$0xf]
    %v20 = vld [vmem:[%s1] sm:$0xf]
    %v21 = vld [vmem:[%s1 + $0x4] sm:$0xf]
    %v22 = vld [vmem:[%s1 + $0x8] sm:$0xf]
    %v23 = vld [vmem:[%s1 + $0xc] sm:$0xf]
    %v24 = vld [vmem:[%s1 + $0x10] sm:$0xf]
    %v25 = vld [vmem:[%s1 + $0x14] sm:$0xf]
    %v26 = vld [vmem:[%s1 + $0x18] sm:$0xf]
    %v27 = vld [vmem:[%s1 + $0x1c] sm:$0xf]
    %v28 = vld [vmem:[%s2] sm:$0x1]
    %v30 = vlaneseq
    %v31 = vshrl.u32 %v30, 7
    %v32 = vsub.s32 0, %v31
    %v33 = vrot.slane %v28, %v32
    %v39 = vunpack.c.l.b16 %v16
    %v40 = vunpack.c.l.b16 %v17
    %v41 = vunpack.c.l.b16 %v18
    %v42 = vunpack.c.l.b16 %v19
    %v43 = vpack.c.b16 %v40, %v39
    %v44 = vpack.c.b16 %v42, %v41
    %v53 = vunpack.c.l.b16 %v20
    %v54 = vunpack.c.l.b16 %v21
    %v55 = vunpack.c.l.b16 %v22
    %v56 = vunpack.c.l.b16 %v23
    %v57 = vunpack.c.l.b16 %v24
    %v58 = vunpack.c.l.b16 %v25
    %v59 = vunpack.c.l.b16 %v26
    %v60 = vunpack.c.l.b16 %v27
    %v61 = vpack.c.b16 %v54, %v53
    %v62 = vpack.c.b16 %v56, %v55
    %v63 = vpack.c.b16 %v58, %v57
    %v64 = vpack.c.b16 %v60, %v59
    %vm69 = vcmask 523264
    %v71 = vsel %vm69, %v43, 0
    %v74 = vsel %vm69, %v44, 0
    %76 = vmatprep.subr.bf16.mxu0 0
    %77 = vmatpush1.bf16.msra.mxu0 0
    %78 = vmatprep.subr.bf16.mxu0 0
    %79 = vmatpush1.bf16.msra.mxu0 0
    %80 = vmatprep.subr.bf16.mxu0 0
    %81 = vmatpush1.bf16.msra.mxu0 0
    %82 = vmatprep.subr.bf16.mxu0 0
    %83 = vmatpush1.bf16.msra.mxu0 0
    %84 = vmatprep.subr.bf16.mxu0 0
    %85 = vmatpush1.bf16.msra.mxu0 %v64
    %86 = vmatprep.subr.bf16.mxu0 0
    %87 = vmatpush1.bf16.msra.mxu0 %v63
    %88 = vmatprep.subr.bf16.mxu0 0
    %89 = vmatpush1.bf16.msra.mxu0 %v62
    %90 = vmatprep.subr.bf16.mxu0 0
    %91 = vmatpush1.bf16.msra.mxu0 %v61
    %92 = vmatprep.subr.bf16.mxu0 0
    %93 = vmatpush2.bf16.msra.mxu0 0
    %94 = vmatprep.subr.bf16.mxu0 0
    %95 = vmatpush2.bf16.msra.mxu0 0
    %96 = vmatprep.subr.bf16.mxu0 0
    %97 = vmatpush2.bf16.msra.mxu0 0
    %98 = vmatprep.subr.bf16.mxu0 0
    %99 = vmatpush2.bf16.msra.mxu0 0
    %100 = vmatprep.subr.bf16.mxu0 0
    %101 = vmatpush2.bf16.msra.mxu0 0
    %102 = vmatprep.subr.bf16.mxu0 0
    %103 = vmatpush2.bf16.msra.mxu0 0
    %104 = vmatprep.subr.bf16.mxu0 0
    %105 = vmatpush2.bf16.msra.mxu0 0
    %106 = vmatprep.subr.bf16.mxu0 0
    %107 = vmatpush2.bf16.msra.mxu0 0
    %108 = vmatprep.mubr.bf16.mxu0 0
    %109 = vmatmul.mubr.bf16.gmra.mxu0 %v71
    %v110 = vpop.f32.mrf.mxu0
    %v111 = vadd.f32 %v33, %v110
    %v112 = vpop.f32.mrf.mxu0
    %v113 = vpop.f32.mrf.mxu0
    %v114 = vadd.f32 %v33, %v113
    %v115 = vpop.f32.mrf.mxu0
    %116 = vmatprep.mubr.bf16.mxu0 0
    %117 = vmatmul.mubr.bf16.gmra.mxu0 %v74
    %v118 = vpop.f32.mrf.mxu0
    %v119 = vadd.f32 %v33, %v118
    %v120 = vpop.f32.mrf.mxu0
    %v121 = vpop.f32.mrf.mxu0
    %v122 = vadd.f32 %v33, %v121
    %v123 = vpop.f32.mrf.mxu0
    %124 = vdwg.mxu0
    %vm125 = vcmask 261120
    %126 = vst.msk [vmem:[#allocation2] sm:$0xff] %vm125, %v111
    %127 = vst.msk [vmem:[#allocation2 + $0x8] sm:$0xff] %vm125, %v114
    %128 = vst.msk [vmem:[#allocation2 + $0x10] sm:$0xff] %vm125, %v119
    %129 = vst.msk [vmem:[#allocation2 + $0x18] sm:$0xff] %vm125, %v122
    // Predicated region
    $region14: #{patch_embed_v2.1} parent=1 // pred_check
      _
    $region15: #{patch_embed_v2.1} parent=1 // pred_check_branch
      %131 = sbr.rel (0) target = $region17
    $region16: #{patch_embed_v2.1} parent=1 // pred_region
      %s133 = ssub.s32 512, 512
      %134 = vsyncadd [#allocation3], %s133
      %s135 = sshll.u32 [#allocation2], 4
      %s136 = int_to_ptr.vmem [resolvable:$true] %s135
      %141 = dma.vmem_to_hbm [thread:$0]  %s136, 512, %s3, [#allocation3], 128, 128, 8
    $region17: #{patch_embed_v2.1} parent=1 // pred_fallthru
      _
    // Predicated region
    $region18: #{patch_embed_v2.1} parent=1 // pred_check
      _
    $region19: #{patch_embed_v2.1} parent=1 // pred_check_branch
      %143 = sbr.rel (0) target = $region21
    $region20: #{patch_embed_v2.1} parent=1 // pred_region
      %144 = dma.done [#allocation3], 512
    $region21: #{patch_embed_v2.1} parent=1 // pred_fallthru
      _
    %145 = vsyncpa [#allocation3], 1

</llo_original>
